<compile_context>
chip_gen: v7x
topology: tpu7x:2x2x1
jax: 0.10.0
libtpu: 0.0.40
codegen_flags: <defaults>
</compile_context>

<pallas_src>
import math

import jax
import jax.numpy as jnp
from jax.experimental import pallas as pl
from jax.experimental.pallas import tpu as pltpu


def _round_up(x, m):
    return ((x + m - 1) // m) * m


def _cdiv(a, b):
    return -(-a // b)


def _pe_kernel(pos_ref, sel_ref, consts_ref, out_ref):
    """out[r, j] = sin( pos[r*fold + j//h] * div[j] + phase[j] )

    pos_ref    : (K, TILE_R)  bf16  3-way split position components,
                                    rows along lanes (lane-dense stream)
    sel_ref    : (K, LANE_W)  bf16  0/1 block-selection matrix (constant)
    consts_ref : (2, LANE_W)  f32   row 0 = div_term per column, row 1 = phase
    out_ref    : (TILE_R, LANE_W)
    """
    # MXU: expand/transpose positions to (TILE_R, LANE_W).  Components are
    # bf16-exact and the selector is 0/1, so the result is f32-accurate no
    # matter how the MXU decomposes the multiply.
    pos_exp = jax.lax.dot_general(
        pos_ref[...], sel_ref[...],
        dimension_numbers=(((0,), (0,)), ((), ())),       # contract over K
        preferred_element_type=jnp.float32,
    )
    # VPU: exact f32 scale by div_term and phase add (cos(x) == sin(x + pi/2)).
    arg = pos_exp * consts_ref[0:1, :] + consts_ref[1:2, :]
    out_ref[...] = jnp.sin(arg).astype(out_ref.dtype)


def positional_encoding(position, hidden_size, dropout_p=0.1, training=False,
                        out_dtype=jnp.float32):
    """JAX/Pallas equivalent of PositionalEncoding.forward (eval mode)."""
    h = int(hidden_size)
    assert h % 2 == 0, "hidden_size must be even (matches the torch module)"

    pos = jnp.asarray(position, jnp.float32).reshape(-1)
    n = pos.shape[0]

    # ---- lane folding: pack `fold` original rows into one kernel row --------
    fold = 128 // math.gcd(h, 128)          # == lcm(h, 128) // h
    if fold > 16:
        fold = 1                            # pathological h: fall back, pad lanes
    lane_w = fold * h
    lane_w_pad = _round_up(lane_w, 128)     # always lane-dense stores

    # ---- row tiling ----------------------------------------------------------
    rows_total = _cdiv(n, fold)
    if rows_total <= 128:
        tile_r = _round_up(rows_total, 8)
        rows_pad = tile_r
    else:
        target = (1 << 20) // (lane_w_pad * 4)            # ~1 MiB output blocks
        target = max(128, min(2048, (target // 128) * 128))
        want = _round_up(_cdiv(rows_total, 4), 128)       # prefer >= 4 grid steps
        tile_r = max(128, min(target, want))              # multiple of 128
        rows_pad = _round_up(rows_total, tile_r)
    n_pad = rows_pad * fold

    # ---- positions: 3-way bf16 split, (K, rows) with rows along lanes -------
    pos_pad = jnp.pad(pos, (0, n_pad - n))
    c0 = pos_pad.astype(jnp.bfloat16)
    r1 = pos_pad - c0.astype(jnp.float32)
    c1 = r1.astype(jnp.bfloat16)
    r2 = r1 - c1.astype(jnp.float32)
    c2 = r2.astype(jnp.bfloat16)
    comps = jnp.stack([c0, c1, c2])                       # (3, n_pad) bf16
    # pos_parts[s*fold + i, r] = component s of pos[r*fold + i]
    pos_parts = jnp.moveaxis(comps.reshape(3, rows_pad, fold), 2, 1)
    pos_parts = pos_parts.reshape(3 * fold, rows_pad)
    k = 3 * fold
    k_pad = _round_up(k, 16)                              # bf16 sublane tile
    if k_pad > k:
        pos_parts = jnp.pad(pos_parts, ((0, k_pad - k), (0, 0)))

    # ---- hoisted constants ---------------------------------------------------
    col = jnp.arange(lane_w_pad, dtype=jnp.int32)
    blk = col // h                                        # fold-block id per column
    sel = (blk[None, :] == jnp.arange(fold, dtype=jnp.int32)[:, None])
    sel = jnp.tile(sel.astype(jnp.bfloat16), (3, 1))      # rows ordered s*fold + i
    if k_pad > k:
        sel = jnp.pad(sel, ((0, k_pad - k), (0, 0)))      # (k_pad, lane_w_pad)

    half = jnp.exp(jnp.arange(0, h, 2, dtype=jnp.float32)
                   * (-math.log(10000.0) / h))            # (h/2,)
    div_full = jnp.repeat(half, 2)                        # col j uses half[j//2]
    phase_full = jnp.tile(jnp.array([0.0, math.pi / 2.0], jnp.float32), h // 2)
    pad_c = lane_w_pad - lane_w
    div_row = jnp.pad(jnp.tile(div_full, fold), (0, pad_c))
    phase_row = jnp.pad(jnp.tile(phase_full, fold), (0, pad_c))
    consts = jnp.stack([div_row, phase_row])              # (2, lane_w_pad) f32

    # ---- pallas call ---------------------------------------------------------
    out = pl.pallas_call(
        _pe_kernel,
        out_shape=jax.ShapeDtypeStruct((rows_pad, lane_w_pad), out_dtype),
        grid=(rows_pad // tile_r,),
        in_specs=[
            pl.BlockSpec((k_pad, tile_r), lambda i: (0, i)),
            pl.BlockSpec((k_pad, lane_w_pad), lambda i: (0, 0)),
            pl.BlockSpec((2, lane_w_pad), lambda i: (0, 0)),
        ],
        out_specs=pl.BlockSpec((tile_r, lane_w_pad), lambda i: (i, 0)),
        compiler_params=pltpu.CompilerParams(
            dimension_semantics=("parallel",),            # row tiles independent
            vmem_limit_bytes=32 * 1024 * 1024,
        ),
    )(pos_parts, sel, consts)

    # Row-major un-fold back to (N, H); reshape/slice are layout-only.
    if fold == 1:
        pe = out[:n, :h]
    else:
        pe = out.reshape(rows_pad * fold, h)[:n]

    # Eval-mode dropout is identity.
    del dropout_p, training
    return pe


def _reference(position, hidden_size):
    """Pure-JAX reference mirroring the torch forward (eval mode)."""
    position = jnp.asarray(position, jnp.float32).reshape(-1, 1)
    div_term = jnp.exp(jnp.arange(0, hidden_size, 2, dtype=jnp.float32)
                       * (-math.log(10000.0) / hidden_size))
    arg = position * div_term[None, :]
    pe = jnp.empty((position.shape[0], hidden_size), jnp.float32)
    pe = pe.at[:, 0::2].set(jnp.sin(arg))
    pe = pe.at[:, 1::2].set(jnp.cos(arg))
    return pe


if __name__ == "__main__":
    hidden_size = 32
    n = 8  # number of positions (seq length)

    key = jax.random.PRNGKey(0)
    # Deterministic "positions" (arbitrary floats, like time indices).
    position = jax.random.uniform(key, (n, 1), dtype=jnp.float32) * 100.0

    out = positional_encoding(position, hidden_size)
    out = jax.block_until_ready(out)

    ref = _reference(position, hidden_size)
    assert out.shape == (n, hidden_size)
    # cos is computed as sin(x + pi/2); allow float32-level tolerance.
    assert jnp.allclose(out, ref, atol=1e-4, rtol=1e-4), "mismatch vs reference"

    print("KERNEL_OK")
</pallas_src>

<mosaic_0001>
module attributes {stable_mosaic.version = 11 : i64} {
  func.func @_pe_kernel(%arg0: i32, %arg1: memref<16x8xbf16, #tpu.memory_space<vmem>>, %arg2: memref<16x128xbf16, #tpu.memory_space<vmem>>, %arg3: memref<2x128xf32, #tpu.memory_space<vmem>>, %arg4: memref<8x128xf32, #tpu.memory_space<vmem>>) attributes {dimension_semantics = [#tpu.dimension_semantics<parallel>], iteration_bounds = array<i64: 1>, scalar_prefetch = 0 : i64, scratch_operands = 0 : i64, tpu.core_type = #tpu.core_type<tc>, window_params = [{transform_indices = @transform_0, window_bounds = array<i64: 16, 8>}, {pipeline_mode = #tpu.pipeline_mode<synchronous>, transform_indices = @transform_1, window_bounds = array<i64: 16, 128>}, {pipeline_mode = #tpu.pipeline_mode<synchronous>, transform_indices = @transform_2, window_bounds = array<i64: 2, 128>}, {transform_indices = @transform_3, window_bounds = array<i64: 8, 128>}]} {
    %c0 = arith.constant 0 : index
    %c0_0 = arith.constant 0 : index
    %0 = vector.load %arg1[%c0, %c0_0] : memref<16x8xbf16, #tpu.memory_space<vmem>>, vector<16x8xbf16>
    %c0_1 = arith.constant 0 : index
    %c0_2 = arith.constant 0 : index
    %1 = vector.load %arg2[%c0_1, %c0_2] : memref<16x128xbf16, #tpu.memory_space<vmem>>, vector<16x128xbf16>
    %cst = arith.constant dense<0.000000e+00> : vector<8x128xf32>
    %2 = tpu.matmul %0, %1, %cst {dimension_numbers = #tpu.dot_dimension_numbers<[0], [0], [1], [1], [0, 1, 1, 1], [], []>} : vector<16x8xbf16>, vector<16x128xbf16>, vector<8x128xf32> -> vector<8x128xf32>
    %c0_3 = arith.constant 0 : index
    %c0_4 = arith.constant 0 : index
    %3 = vector.load %arg3[%c0_3, %c0_4] : memref<2x128xf32, #tpu.memory_space<vmem>>, vector<1x128xf32>
    %4 = vector.broadcast %3 : vector<1x128xf32> to vector<8x128xf32>
    %5 = arith.mulf %2, %4 : vector<8x128xf32>
    %c1 = arith.constant 1 : index
    %c0_5 = arith.constant 0 : index
    %6 = vector.load %arg3[%c1, %c0_5] : memref<2x128xf32, #tpu.memory_space<vmem>>, vector<1x128xf32>
    %7 = vector.broadcast %6 : vector<1x128xf32> to vector<8x128xf32>
    %8 = arith.addf %5, %7 : vector<8x128xf32>
    %9 = math.sin %8 : vector<8x128xf32>
    %c0_6 = arith.constant 0 : index
    %c0_7 = arith.constant 0 : index
    %10 = vector.load %arg4[%c0_6, %c0_7] : memref<8x128xf32, #tpu.memory_space<vmem>>, vector<8x128xf32>
    tpu.vector_store %arg4[%c0_6, %c0_7], %9 {strides = array<i32>} : memref<8x128xf32, #tpu.memory_space<vmem>>, vector<8x128xf32>,
    return
  }
  func.func @transform_0(%arg0: i32) -> (i32, i32) {
    %c0_i32 = arith.constant 0 : i32
    %c0_i32_0 = arith.constant 0 : i32
    return %c0_i32, %arg0 : i32, i32
  }
  func.func @transform_1(%arg0: i32) -> (i32, i32) {
    %c0_i32 = arith.constant 0 : i32
    %c0_i32_0 = arith.constant 0 : i32
    %c0_i32_1 = arith.constant 0 : i32
    return %c0_i32, %c0_i32_0 : i32, i32
  }
  func.func @transform_2(%arg0: i32) -> (i32, i32) {
    %c0_i32 = arith.constant 0 : i32
    %c0_i32_0 = arith.constant 0 : i32
    %c0_i32_1 = arith.constant 0 : i32
    return %c0_i32, %c0_i32_0 : i32, i32
  }
  func.func @transform_3(%arg0: i32) -> (i32, i32) {
    %c0_i32 = arith.constant 0 : i32
    %c0_i32_0 = arith.constant 0 : i32
    return %arg0, %c0_i32 : i32, i32
  }
}

</mosaic_0001>

<llo_original>
// kernel: tpu_custom_call.1
$region0: #{tpu_custom_call.1}
  #allocation0 [shape = 'u32[]', space=smem, size = 0x4, offset = 0x4, fixed_abs, tag = 'smem constant byte address 0x4 - core index']
  #allocation1 [shape = 'u32[144,128]{1,0:T(1,128)}', space=vmem, size = 0x12000, scoped, tag = 'internal scratch']
  %s0 = inlined_call_operand.vmem [shape: bf16[16,8], index: 0, kind: input, shape index: {}]
  %s1 = inlined_call_operand.vmem [shape: bf16[16,128], index: 1, kind: input, shape index: {}]
  %s2 = inlined_call_operand.vmem [shape: f32[2,128], index: 2, kind: input, shape index: {}]
  %s3 = inlined_call_operand.hbm [shape: f32[8,128], index: 3, kind: output, shape index: {}]
  %s4 = sld [smem:[#allocation0]]
  $region22: #{tpu_custom_call.1} parent=0
    _
  %s6 = ssub.s32 1, %s4
  %s7 = scalar_select 0, %s6, %s4
  $region1: #{tpu_custom_call.1} parent=0
    #allocation2 [shape = 'u8[4096]{0}', space=vmem, size = 0x1000, scoped, tag = 'output window, operand 0, single buffered']
    #allocation3 [shape = 's32[1]{0}', space=sflag, size = 0x4, scoped, tag = 'scoped memory for tpu_custom_call.1']
    %8 = vsyncpa [#allocation3], 0
    // Predicated region
    $region2: #{tpu_custom_call.1} parent=1 // pred_check
      _
    $region3: #{tpu_custom_call.1} parent=1 // pred_check_branch
      %10 = sbr.rel (0) target = $region5
    $region4: #{tpu_custom_call.1} parent=1 // pred_region
      _
    $region5: #{tpu_custom_call.1} parent=1 // pred_fallthru
      _
    // Predicated region
    $region6: #{tpu_custom_call.1} parent=1 // pred_check
      _
    $region7: #{tpu_custom_call.1} parent=1 // pred_check_branch
      %12 = sbr.rel (0) target = $region9
    $region8: #{tpu_custom_call.1} parent=1 // pred_region
      _
    $region9: #{tpu_custom_call.1} parent=1 // pred_fallthru
      _
    // Predicated region
    $region10: #{tpu_custom_call.1} parent=1 // pred_check
      _
    $region11: #{tpu_custom_call.1} parent=1 // pred_check_branch
      %14 = sbr.rel (0) target = $region13
    $region12: #{tpu_custom_call.1} parent=1 // pred_region
      _
    $region13: #{tpu_custom_call.1} parent=1 // pred_fallthru
      _
    %v16 = vld [vmem:[%s0] sm:$0xf]
    %v17 = vld [vmem:[%s0 + $0x4] sm:$0xf]
    %v18 = vld [vmem:[%s1] sm:$0xf]
    %v19 = vld [vmem:[%s1 + $0x4] sm:$0xf]
    %v22 = vunpack.c.l.b16 %v16
    %v23 = vunpack.c.l.b16 %v17
    %v24 = vpack.c.b16 %v23, %v22
    %26 = vxpose.xlu0.c.b16.start [1/8] %v24, 128
    %27 = vxpose.xlu0.c.b16.cont [2/8] 0, 128
    %28 = vxpose.xlu0.c.b16.cont [3/8] 0, 128
    %29 = vxpose.xlu0.c.b16.cont [4/8] 0, 128
    %30 = vxpose.xlu0.c.b16.cont [5/8] 0, 128
    %31 = vxpose.xlu0.c.b16.cont [6/8] 0, 128
    %32 = vxpose.xlu0.c.b16.cont [7/8] 0, 128
    %33 = vxpose.xlu0.c.b16.end [8/8] 0, 128
    %v34 = vpop.trf.xlu0
    %v35 = vpop.trf.xlu0
    %v36 = vpop.trf.xlu0
    %v37 = vpop.trf.xlu0
    %v38 = vpop.trf.xlu0
    %v39 = vpop.trf.xlu0
    %v40 = vpop.trf.xlu0
    %v41 = vpop.trf.xlu0
    %v44 = vunpack.c.l.b16 %v18
    %v45 = vunpack.c.l.b16 %v19
    %v46 = vpack.c.b16 %v45, %v44
    %vm48 = vcmask 130048
    %v50 = vsel %vm48, %v34, 0
    %52 = vmatprep.subr.bf16.mxu0 0
    %53 = vmatpush1.bf16.msra.mxu0 %v46
    %54 = vmatprep.subr.bf16.mxu0 0
    %55 = vmatpush1.bf16.msra.mxu0 0
    %56 = vmatprep.subr.bf16.mxu0 0
    %57 = vmatpush1.bf16.msra.mxu0 0
    %58 = vmatprep.subr.bf16.mxu0 0
    %59 = vmatpush1.bf16.msra.mxu0 0
    %60 = vmatprep.subr.bf16.mxu0 0
    %61 = vmatpush1.bf16.msra.mxu0 0
    %62 = vmatprep.subr.bf16.mxu0 0
    %63 = vmatpush1.bf16.msra.mxu0 0
    %64 = vmatprep.subr.bf16.mxu0 0
    %65 = vmatpush1.bf16.msra.mxu0 0
    %66 = vmatprep.subr.bf16.mxu0 0
    %67 = vmatpush1.bf16.msra.mxu0 0
    %68 = vmatprep.subr.bf16.mxu0 0
    %69 = vmatpush1.bf16.msra.mxu0 0
    %70 = vmatprep.subr.bf16.mxu0 0
    %71 = vmatpush1.bf16.msra.mxu0 0
    %72 = vmatprep.subr.bf16.mxu0 0
    %73 = vmatpush1.bf16.msra.mxu0 0
    %74 = vmatprep.subr.bf16.mxu0 0
    %75 = vmatpush1.bf16.msra.mxu0 0
    %76 = vmatprep.subr.bf16.mxu0 0
    %77 = vmatpush1.bf16.msra.mxu0 0
    %78 = vmatprep.subr.bf16.mxu0 0
    %79 = vmatpush1.bf16.msra.mxu0 0
    %80 = vmatprep.subr.bf16.mxu0 0
    %81 = vmatpush1.bf16.msra.mxu0 0
    %82 = vmatprep.subr.bf16.mxu0 0
    %83 = vmatpush1.bf16.msra.mxu0 0
    %84 = vmatprep.mubr.bf16.mxu0 0
    %85 = vmatmul.mubr.bf16.gmra.mrb[0].mxu0 %v50
    %v86 = vpop.f32.mrb[0].mxu0
    %v87 = vadd.f32 0.0, %v86
    %v88 = vpop.f32.mrb[0].mxu0
    %v89 = vpop.f32.mrb[0].mxu0
    %v90 = vpop.f32.mrb[0].mxu0
    %91 = vdwg.mxu0
    %v92 = vld [vmem:[%s2] sm:$0x1]
    %v93 = vlaneseq
    %v94 = vshrl.u32 %v93, 7
    %v95 = vsub.s32 0, %v94
    %v96 = vrot.slane %v92, %v95
    %v97 = vmul.f32 %v87, %v96
    %v98 = vld [vmem:[%s2 + $0x1] sm:$0x1]
    %v99 = vlaneseq
    %v100 = vshrl.u32 %v99, 7
    %v101 = vsub.s32 0, %v100
    %v102 = vrot.slane %v98, %v101
    %v103 = vadd.f32 %v97, %v102
    %v104 = vand.u32 2147483647, %v103
    %vm105 = vcmp.le.f32.partialorder %v104, 0.7853982
    %vm106 = vcmp.lt.s32.totalorder %v103, 0
    %v107 = vand.u32 %v103, 2139095040
    %v108 = vshrl.u32 %v107, 23
    %v109 = vsub.s32 %v108, 127
    %v110 = vand.u32 2147483647, %v103
    %v111 = vand.u32 %v110, 8388607
    %v112 = vor.u32 %v111, 8388608
    %v113 = vsub.s32 0, %v112
    %v114 = vadd.s32 %v109, 1
    %vm115 = vcmp.gt.s32.totalorder %v114, 0
    %v116 = vsel %vm115, %v114, 0
    %v117 = vshrl.u32 %v116, 5
    %v118 = vand.u32 %v116, 31
    %v119 = vsub.s32 32, %v118
    %v120 = vshrl.u32 683565275, %v119
    %v121 = vshll.u32 683565275, %v118
    %v122 = vshrl.u32 2475754826, %v119
    %v123 = vor.u32 %v121, %v122
    %v124 = vshll.u32 2475754826, %v118
    %v125 = vshrl.u32 2131351028, %v119
    %v126 = vor.u32 %v124, %v125
    %v127 = vshll.u32 2131351028, %v118
    %v128 = vshrl.u32 2102212464, %v119
    %v129 = vor.u32 %v127, %v128
    %v130 = vshll.u32 2102212464, %v118
    %v131 = vshrl.u32 920167782, %v119
    %v132 = vor.u32 %v130, %v131
    %v133 = vshll.u32 920167782, %v118
    %v134 = vshrl.u32 1326507024, %v119
    %v135 = vor.u32 %v133, %v134
    %vm136 = vcmp.lt.s32.totalorder %v117, 1
    %vm137 = vcmp.lt.s32.totalorder %v117, 2
    %vm138 = vcmp.lt.s32.totalorder %v117, 3
    %vm139 = vcmp.lt.s32.totalorder %v117, 4
    %v140 = vsel %vm136, %v120, %v123
    %v141 = vsel %vm139, %v129, 2102212464
    %v142 = vsel %vm138, %v126, %v141
    %v143 = vsel %vm137, %v140, %v142
    %v144 = vsel %vm136, %v123, %v126
    %v145 = vsel %vm139, %v132, 920167782
    %v146 = vsel %vm138, %v129, %v145
    %v147 = vsel %vm137, %v144, %v146
    %v148 = vsel %vm136, %v126, %v129
    %v149 = vsel %vm139, %v135, 1326507024
    %v150 = vsel %vm138, %v132, %v149
    %v151 = vsel %vm137, %v148, %v150
    %v152 = vshll.u32 %v112, 8
    %v153 = vmul.u32.u64.compose %v152, %v151
    %v154 = vextract.low.u32 %v153
    %v155 = vextract.high.u32 %v153
    %v156 = vmul.u32.u64.compose %v152, %v147
    %v157 = vextract.low.u32 %v156
    %v158 = vextract.high.u32 %v156
    %v159 = vmul.u32 %v152, %v143
    %v160 = vadd.s32 %v155, %v157
    %vm161 = vc.u32 %v155, %v157
    %v162 = vadd.s32 %v158, 1
    %v163 = vsel %vm161, %v162, %v158
    %v164 = vadd.s32 %v159, %v163
    %v165 = vadd.s32 %v164, 536870912
    %v166 = vshrl.u32 %v165, 30
    %v167 = vshll.u32 %v166, 30
    %v168 = vsub.s32 %v164, %v167
    %vm169 = vcmp.lt.s32.totalorder %v168, 0
    %v170 = vsub.s32 0, %v168
    %v171 = vsel %vm169, %v170, %v168
    %v172 = vclz %v171
    %v173 = vsub.s32 %v172, 2
    %vm174 = vcmp.gt.s32.totalorder 0, %v173
    %v175 = vsel %vm174, 0, %v173
    %v176 = vsub.s32 32, %v175
    %v177 = vshll.u32 %v168, %v175
    %v178 = vshrl.u32 %v160, %v176
    %v179 = vor.u32 %v177, %v178
    %v180 = vsub.s32 4294967266, %v175
    %v181 = vadd.s32 %v180, 127
    %v182 = vshll.u32 %v181, 23
    %v183 = vor.u32 4788187, %v182
    %v184 = vand.u32 2147483647, %v183
    %v186 = vcvt.s32.f32 %v179
    %v187 = vmul.f32 %v186, %v184
    %v188 = vxor.u32 %v187, 2147483648
    %v189 = vsel %vm106, %v188, %v187
    %v190 = vsub.s32 4, %v166
    %v191 = vsel %vm106, %v190, %v166
    %v192 = vsel %vm105, %v103, %v189
    %v193 = vsel %vm105, 0, %v191
    %v194 = vcosq.f32.pop %v192
    %v195 = vsinq.f32.pop %v192
    %vm196 = vweird.f32 %v103
    %v197 = vadd.s32 %v193, 3
    %v198 = vand.u32 %v197, 3
    %vm199 = vcmp.lt.s32.totalorder %v198, 2
    %vm200 = vcmp.eq.s32.totalorder %v198, 0
    %v201 = vxor.u32 %v195, 2147483648
    %v202 = vsel %vm200, %v194, %v201
    %vm203 = vcmp.eq.s32.totalorder %v198, 2
    %v204 = vxor.u32 %v194, 2147483648
    %v205 = vsel %vm203, %v204, %v195
    %v206 = vsel %vm199, %v202, %v205
    %v207 = vsel %vm196, nan, %v206
    %208 = vst [vmem:[#allocation2] sm:$0xff] %v207
    // Predicated region
    $region14: #{tpu_custom_call.1} parent=1 // pred_check
      _
    $region15: #{tpu_custom_call.1} parent=1 // pred_check_branch
      %210 = sbr.rel (0) target = $region17
    $region16: #{tpu_custom_call.1} parent=1 // pred_region
      %s212 = ssub.s32 128, 128
      %213 = vsyncadd [#allocation3], %s212
      %s215 = sshll.u32 [#allocation2], 4
      %s216 = int_to_ptr.vmem [resolvable:$true] %s215
      %218 = dma.vmem_to_hbm [thread:$0]  %s216, 128, %s3, [#allocation3]
    $region17: #{tpu_custom_call.1} parent=1 // pred_fallthru
      _
    // Predicated region
    $region18: #{tpu_custom_call.1} parent=1 // pred_check
      _
    $region19: #{tpu_custom_call.1} parent=1 // pred_check_branch
      %220 = sbr.rel (0) target = $region21
    $region20: #{tpu_custom_call.1} parent=1 // pred_region
      %221 = dma.done [#allocation3], 128
    $region21: #{tpu_custom_call.1} parent=1 // pred_fallthru
      _
    %222 = vsyncpa [#allocation3], 1

</llo_original>
